<compile_context>
chip_gen: v7x
topology: tpu7x:2x2x1
jax: 0.10.0
libtpu: 0.0.40
codegen_flags: <defaults>
</compile_context>

<pallas_src>
import functools

import jax
import jax.numpy as jnp
from jax.experimental import pallas as pl
from jax.experimental.pallas import tpu as pltpu


# ----------------------------------------------------------------------------
# Kernel 1: encoder-side attention projection (hoisted, run once per sequence)
#   enc_proj[b, s, :] = enc[b, s, :] @ W_attn_enc + b
# ----------------------------------------------------------------------------
def enc_proj_kernel(enc_ref, attn_we_ref, attn_b_ref, out_ref):
    attn_we = attn_we_ref[...]
    proj = jnp.dot(enc_ref[...].astype(attn_we.dtype), attn_we,
                   preferred_element_type=jnp.float32)            # [rb, Hd]
    out_ref[...] = (proj + attn_b_ref[...]).astype(out_ref.dtype)


def precompute_enc_proj(enc_bf, attn_we, attn_b, out_dtype=jnp.float32):
    """Tiled over B*S rows ("parallel" axis). Degenerates to one block at small sizes."""
    B, S, E2 = enc_bf.shape
    Hd = attn_we.shape[1]
    rows = B * S
    rb = rows
    for cand in (1024, 512, 256):
        if rows % cand == 0:
            rb = cand
            break
    out = pl.pallas_call(
        enc_proj_kernel,
        out_shape=jax.ShapeDtypeStruct((rows, Hd), out_dtype),
        grid=(rows // rb,),
        in_specs=[pl.BlockSpec((rb, E2), lambda i: (i, 0)),
                  pl.BlockSpec((E2, Hd), lambda i: (0, 0)),
                  pl.BlockSpec((1, Hd), lambda i: (0, 0))],
        out_specs=pl.BlockSpec((rb, Hd), lambda i: (i, 0)),
        compiler_params=pltpu.CompilerParams(
            dimension_semantics=("parallel",)),
    )(enc_bf.reshape(rows, E2), attn_we, attn_b.astype(jnp.float32))
    return out.reshape(B, S, Hd)


# ----------------------------------------------------------------------------
# Kernel 2: fused multi-step decoder. grid=(T,), weights/enc resident in VMEM,
# hidden/cell carried in the resident output refs across steps.
# ----------------------------------------------------------------------------
def decoder_seq_kernel(emb_ref, h0_ref, c0_ref, enc_ref, encp_ref,
                       attn_wh_ref, v_ref, w_lstm_ref, b_lstm_ref,
                       w_fc_ref, fc_b_ref,
                       pred_ref, hout_ref, cout_ref):
    t = pl.program_id(0)

    # t == 0: seed the recurrent state (carried in the resident output refs).
    @pl.when(t == 0)
    def _():
        hout_ref[...] = h0_ref[...].astype(jnp.float32)
        cout_ref[...] = c0_ref[...].astype(jnp.float32)

    emb = emb_ref[...].astype(jnp.float32)        # [B, E]   (leading T squeezed)
    hid = hout_ref[...]                           # [B, H]   f32 carry
    cell = cout_ref[...]                          # [B, H]
    enc = enc_ref[...].astype(jnp.float32)        # [B, S, E2]
    encp = encp_ref[...].astype(jnp.float32)      # [B, S, Hd]

    attn_wh = attn_wh_ref[...]                    # [H, Hd]        (f32 or bf16)
    v_row = v_ref[...]                            # [1, Hd]        f32
    w_lstm = w_lstm_ref[...]                      # [E+E2+H, 4H]   (f32 or bf16)
    b_lstm = b_lstm_ref[...]                      # [1, 4H]        f32
    w_fc = w_fc_ref[...]                          # [H+E2+E, Opad] (f32 or bf16)
    fc_b = fc_b_ref[...]                          # [1, Opad]      f32

    H = hid.shape[1]

    # ---- attention: energy = tanh(enc_proj + hidden @ W_h) ----
    h_part = jnp.dot(hid.astype(attn_wh.dtype), attn_wh,
                     preferred_element_type=jnp.float32)          # [B, Hd]
    energy = jnp.tanh(encp + h_part[:, None, :])                  # [B, S, Hd]

    # scores = <energy, v>: VPU multiply + lane reduce (no degenerate MXU dot)
    scores = jnp.sum(energy * v_row[None, :, :], axis=-1)         # [B, S]
    scores = scores - jnp.max(scores, axis=1, keepdims=True)
    ex = jnp.exp(scores)
    a = ex / jnp.sum(ex, axis=1, keepdims=True)                   # exact softmax

    # weighted context: elementwise + sublane reduce (not a batched M=1 bmm)
    weighted = jnp.sum(a[:, :, None] * enc, axis=1)               # [B, E2]

    # ---- LSTM cell: one fused gate matmul, PyTorch gate order (i, f, g, o) ----
    x_cat = jnp.concatenate([emb, weighted, hid], axis=1)         # [B, E+E2+H]
    gates = jnp.dot(x_cat.astype(w_lstm.dtype), w_lstm,
                    preferred_element_type=jnp.float32) + b_lstm  # [B, 4H]
    sig_all = jax.nn.sigmoid(gates)     # one full-vreg EUP push
    tanh_all = jnp.tanh(gates)          # one full-vreg EUP push
    i_g = sig_all[:, 0:H]
    f_g = sig_all[:, H:2 * H]
    g_g = tanh_all[:, 2 * H:3 * H]
    o_g = sig_all[:, 3 * H:4 * H]
    c_new = f_g * cell + i_g * g_g
    h_new = o_g * jnp.tanh(c_new)

    # ---- fc_out(cat(output, weighted, embedded)): one fused, 128-lane-padded dot ----
    y_cat = jnp.concatenate([h_new, weighted, emb], axis=1)       # [B, H+E2+E]
    pred = jnp.dot(y_cat.astype(w_fc.dtype), w_fc,
                   preferred_element_type=jnp.float32) + fc_b     # [B, Opad]

    pred_ref[...] = pred.astype(pred_ref.dtype)
    hout_ref[...] = h_new
    cout_ref[...] = c_new


# ----------------------------------------------------------------------------
# One-time parameter packing / prep (hoisted out of the decode path)
# ----------------------------------------------------------------------------
def pack_params(p, param_dtype=jnp.float32):
    """Fuse split PyTorch weights once; pad fc_out columns to 128 lanes; store
    the big MXU-dot matrices in `param_dtype` (bf16 halves per-step HBM bytes)."""
    w_fc = jnp.concatenate([p["fcw_h"], p["fcw_w"], p["fcw_e"]], axis=0)
    fc_b = p["fc_b"].reshape(1, -1)
    out_dim = w_fc.shape[1]
    o_pad = ((out_dim + 127) // 128) * 128
    if o_pad != out_dim:
        w_fc = jnp.pad(w_fc, ((0, 0), (0, o_pad - out_dim)))
        fc_b = jnp.pad(fc_b, ((0, 0), (0, o_pad - out_dim)))
    return {
        "attn_wh": p["attn_wh"].astype(param_dtype),                         # [H, Hd]
        "v_row": p["v_w"].reshape(1, -1).astype(jnp.float32),                # [1, Hd]
        "w_lstm": jnp.concatenate([p["wih_e"], p["wih_w"], p["whh"]],
                                  axis=0).astype(param_dtype),               # [E+E2+H, 4H]
        "b_lstm": p["b_lstm"].reshape(1, -1).astype(jnp.float32),            # [1, 4H] (b_ih+b_hh)
        "w_fc": w_fc.astype(param_dtype),                                    # [H+E2+E, Opad]
        "fc_b": fc_b.astype(jnp.float32),                                    # [1, Opad]
    }


def prepare_decoder(params, enc_bf, param_dtype=jnp.float32):
    """One-time per (params, encoder sequence) prep: pack weights, cast encoder
    storage, precompute the encoder-side attention projection."""
    packed = pack_params(params, param_dtype)
    enc_store = enc_bf.astype(param_dtype)
    enc_proj = precompute_enc_proj(enc_store,
                                   params["attn_we"].astype(param_dtype),
                                   params["attn_b"].reshape(1, -1),
                                   out_dtype=param_dtype)
    return packed, enc_store, enc_proj


# ----------------------------------------------------------------------------
# Wrappers
# ----------------------------------------------------------------------------
@functools.partial(jax.jit, static_argnames=("out_dim",))
def decoder_decode_sequence(inputs_tbe, h0, c0, enc_bf, enc_proj, packed, *,
                            out_dim):
    """Run all T decode steps in a single pallas_call (grid over T).

    inputs_tbe : [T, B, E]   stacked per-step decoder inputs
    h0, c0     : [B, H]      initial LSTM state
    enc_bf     : [B, S, E2]  encoder outputs, batch-major
    enc_proj   : [B, S, Hd]  precomputed enc @ W_attn_enc + b
    Returns (preds [T, B, out_dim], h_T [B, H], c_T [B, H]).
    """
    T, B, E = inputs_tbe.shape
    H = h0.shape[1]
    _, S, E2 = enc_bf.shape
    Hd = enc_proj.shape[2]
    o_pad = packed["w_fc"].shape[1]

    def resident(shape):
        n = len(shape)
        return pl.BlockSpec(shape, lambda t: (0,) * n)   # DMA once, stays in VMEM

    preds_pad, h_out, c_out = pl.pallas_call(
        decoder_seq_kernel,
        out_shape=(
            jax.ShapeDtypeStruct((T, B, o_pad), jnp.float32),
            jax.ShapeDtypeStruct((B, H), jnp.float32),
            jax.ShapeDtypeStruct((B, H), jnp.float32),
        ),
        grid=(T,),
        in_specs=[
            pl.BlockSpec((None, B, E), lambda t: (t, 0, 0)),   # step-t input
            resident((B, H)),                                  # h0
            resident((B, H)),                                  # c0
            resident((B, S, E2)),                              # enc
            resident((B, S, Hd)),                              # enc_proj
            resident(packed["attn_wh"].shape),
            resident(packed["v_row"].shape),
            resident(packed["w_lstm"].shape),
            resident(packed["b_lstm"].shape),
            resident(packed["w_fc"].shape),
            resident(packed["fc_b"].shape),
        ],
        out_specs=(
            pl.BlockSpec((None, B, o_pad), lambda t: (t, 0, 0)),  # lane-dense preds
            resident((B, H)),                                     # h carry / final
            resident((B, H)),                                     # c carry / final
        ),
        compiler_params=pltpu.CompilerParams(
            dimension_semantics=("arbitrary",)),
    )(inputs_tbe, h0, c0, enc_bf, enc_proj,
      packed["attn_wh"], packed["v_row"], packed["w_lstm"], packed["b_lstm"],
      packed["w_fc"], packed["fc_b"])
    return preds_pad[:, :, :out_dim], h_out, c_out


def decoder_forward(inp, hidden, cell, enc_bf, enc_proj, packed, out_dim):
    """Single decode step matching the PyTorch Decoder.forward semantics
    (input [B, E], hidden/cell [B, H], encoder_outputs batch-major [B, S, E2]).
    Dropout is identity (eval mode)."""
    preds, h, c = decoder_decode_sequence(inp[None], hidden, cell, enc_bf,
                                          enc_proj, packed, out_dim=out_dim)
    return preds[0], h, c


# ----------------------------------------------------------------------------
# Pure-JAX reference matching the PyTorch forward semantics
# ----------------------------------------------------------------------------
def reference_step(inp, hidden, cell, enc, p):
    e_part = enc.reshape(-1, enc.shape[-1]) @ p["attn_we"]
    h_part = hidden @ p["attn_wh"]
    energy = jnp.tanh(e_part.reshape(enc.shape[0], enc.shape[1], -1)
                      + h_part[:, None, :] + p["attn_b"][None, :, :])
    scores = (energy.reshape(-1, energy.shape[-1]) @ p["v_w"]).reshape(enc.shape[:2])
    a = jax.nn.softmax(scores, axis=1)
    weighted = jnp.einsum("bs,bse->be", a, enc)
    gates = inp @ p["wih_e"] + weighted @ p["wih_w"] + hidden @ p["whh"] + p["b_lstm"]
    H = hidden.shape[1]
    i = jax.nn.sigmoid(gates[:, :H]); f = jax.nn.sigmoid(gates[:, H:2 * H])
    g = jnp.tanh(gates[:, 2 * H:3 * H]); o = jax.nn.sigmoid(gates[:, 3 * H:4 * H])
    c = f * cell + i * g
    h = o * jnp.tanh(c)
    pred = h @ p["fcw_h"] + weighted @ p["fcw_w"] + inp @ p["fcw_e"] + p["fc_b"]
    return pred, h, c


def reference_sequence(inputs_tbe, hidden, cell, enc, p):
    preds = []
    for t in range(inputs_tbe.shape[0]):
        pr, hidden, cell = reference_step(inputs_tbe[t], hidden, cell, enc, p)
        preds.append(pr)
    return jnp.stack(preds, axis=0), hidden, cell


if __name__ == "__main__":
    # small, forward-consistent sizes
    B, S, T = 8, 8, 3
    emb_dim, enc_hid, dec_hid, output_dim = 16, 32, 32, 16
    E2 = 2 * enc_hid

    key = jax.random.PRNGKey(0)
    ks = jax.random.split(key, 20)
    scale = 0.1

    # inputs (encoder_outputs built batch-first directly; original is [S,B,2*Eh])
    hidden = jax.random.normal(ks[1], (B, dec_hid), jnp.float32)
    cell = jax.random.normal(ks[2], (B, dec_hid), jnp.float32)
    enc_out = jax.random.normal(ks[3], (B, S, E2), jnp.float32)
    inputs_tbe = jax.random.normal(ks[4], (T, B, emb_dim), jnp.float32)

    # deterministic synthetic parameters (shapes per the PyTorch __init__)
    params = {
        # Attention: nn.Linear(2*Eh + dec_hid, dec_hid) split into [hidden | enc] parts
        "attn_wh": scale * jax.random.normal(ks[5], (dec_hid, dec_hid), jnp.float32),
        "attn_we": scale * jax.random.normal(ks[6], (E2, dec_hid), jnp.float32),
        "attn_b": scale * jax.random.normal(ks[7], (1, dec_hid), jnp.float32),
        "v_w": scale * jax.random.normal(ks[8], (dec_hid, 1), jnp.float32),
        # LSTM(2*Eh + emb_dim, dec_hid): weight_ih split into [emb | weighted] parts
        "wih_e": scale * jax.random.normal(ks[9], (emb_dim, 4 * dec_hid), jnp.float32),
        "wih_w": scale * jax.random.normal(ks[10], (E2, 4 * dec_hid), jnp.float32),
        "whh": scale * jax.random.normal(ks[11], (dec_hid, 4 * dec_hid), jnp.float32),
        "b_lstm": scale * jax.random.normal(ks[12], (1, 4 * dec_hid), jnp.float32),
        # fc_out(2*Eh + dec_hid + emb_dim, output_dim) split into [out | weighted | emb]
        "fcw_h": scale * jax.random.normal(ks[13], (dec_hid, output_dim), jnp.float32),
        "fcw_w": scale * jax.random.normal(ks[14], (E2, output_dim), jnp.float32),
        "fcw_e": scale * jax.random.normal(ks[15], (emb_dim, output_dim), jnp.float32),
        "fc_b": scale * jax.random.normal(ks[16], (1, output_dim), jnp.float32),
    }

    # ---- one-time prep (pack weights, precompute enc projection) ----
    packed, enc_store, enc_proj = prepare_decoder(params, enc_out, jnp.float32)
    jax.block_until_ready(enc_proj)

    # ---- fused multi-step decode: ONE pallas_call for all T steps ----
    preds_k, h_k, c_k = decoder_decode_sequence(inputs_tbe, hidden, cell,
                                                enc_store, enc_proj, packed,
                                                out_dim=output_dim)
    jax.block_until_ready((preds_k, h_k, c_k))

    preds_r, h_r, c_r = reference_sequence(inputs_tbe, hidden, cell, enc_out, params)
    assert jnp.allclose(preds_k, preds_r, atol=2e-3, rtol=2e-3), "pred mismatch (f32)"
    assert jnp.allclose(h_k, h_r, atol=2e-3, rtol=2e-3), "hidden mismatch (f32)"
    assert jnp.allclose(c_k, c_r, atol=2e-3, rtol=2e-3), "cell mismatch (f32)"

    # ---- single-step forward wrapper (matches the PyTorch forward) ----
    pred1, h1, c1 = decoder_forward(inputs_tbe[0], hidden, cell,
                                    enc_store, enc_proj, packed, output_dim)
    jax.block_until_ready((pred1, h1, c1))
    pred1_r, h1_r, c1_r = reference_step(inputs_tbe[0], hidden, cell, enc_out, params)
    assert jnp.allclose(pred1, pred1_r, atol=2e-3, rtol=2e-3)
    assert jnp.allclose(h1, h1_r, atol=2e-3, rtol=2e-3)
    assert jnp.allclose(c1, c1_r, atol=2e-3, rtol=2e-3)

    # ---- bf16 weight / encoder storage path (halves per-step HBM traffic) ----
    packed16, enc16, encp16 = prepare_decoder(params, enc_out, jnp.bfloat16)
    preds_b, h_b, c_b = decoder_decode_sequence(inputs_tbe, hidden, cell,
                                                enc16, encp16, packed16,
                                                out_dim=output_dim)
    jax.block_until_ready((preds_b, h_b, c_b))
    assert jnp.allclose(preds_b, preds_r, atol=5e-2, rtol=5e-2), "pred mismatch (bf16)"
    assert jnp.allclose(h_b, h_r, atol=5e-2, rtol=5e-2), "hidden mismatch (bf16)"
    assert jnp.allclose(c_b, c_r, atol=5e-2, rtol=5e-2), "cell mismatch (bf16)"

    print("KERNEL_OK")
</pallas_src>

<mosaic_0001>
module attributes {stable_mosaic.version = 11 : i64} {
  func.func @enc_proj_kernel(%arg0: i32, %arg1: memref<64x64xf32, #tpu.memory_space<vmem>>, %arg2: memref<64x32xf32, #tpu.memory_space<vmem>>, %arg3: memref<1x32xf32, #tpu.memory_space<vmem>>, %arg4: memref<64x32xf32, #tpu.memory_space<vmem>>) attributes {dimension_semantics = [#tpu.dimension_semantics<parallel>], iteration_bounds = array<i64: 1>, scalar_prefetch = 0 : i64, scratch_operands = 0 : i64, tpu.core_type = #tpu.core_type<tc>, window_params = [{transform_indices = @transform_0, window_bounds = array<i64: 64, 64>}, {pipeline_mode = #tpu.pipeline_mode<synchronous>, transform_indices = @transform_1, window_bounds = array<i64: 64, 32>}, {pipeline_mode = #tpu.pipeline_mode<synchronous>, transform_indices = @transform_2, window_bounds = array<i64: 1, 32>}, {transform_indices = @transform_3, window_bounds = array<i64: 64, 32>}]} {
    %c0 = arith.constant 0 : index
    %c0_0 = arith.constant 0 : index
    %0 = vector.load %arg2[%c0, %c0_0] : memref<64x32xf32, #tpu.memory_space<vmem>>, vector<64x32xf32>
    %c0_1 = arith.constant 0 : index
    %c0_2 = arith.constant 0 : index
    %1 = vector.load %arg1[%c0_1, %c0_2] : memref<64x64xf32, #tpu.memory_space<vmem>>, vector<64x64xf32>
    %cst = arith.constant dense<0.000000e+00> : vector<64x32xf32>
    %2 = tpu.matmul %1, %0, %cst {dimension_numbers = #tpu.dot_dimension_numbers<[1], [0], [0], [1], [0, 0, 1, 1], [], []>} : vector<64x64xf32>, vector<64x32xf32>, vector<64x32xf32> -> vector<64x32xf32>
    %c0_3 = arith.constant 0 : index
    %c0_4 = arith.constant 0 : index
    %3 = vector.load %arg3[%c0_3, %c0_4] : memref<1x32xf32, #tpu.memory_space<vmem>>, vector<1x32xf32>
    %4 = vector.broadcast %3 : vector<1x32xf32> to vector<64x32xf32>
    %5 = arith.addf %2, %4 : vector<64x32xf32>
    %c0_5 = arith.constant 0 : index
    %c0_6 = arith.constant 0 : index
    %6 = vector.load %arg4[%c0_5, %c0_6] : memref<64x32xf32, #tpu.memory_space<vmem>>, vector<64x32xf32>
    tpu.vector_store %arg4[%c0_5, %c0_6], %5 {strides = array<i32>} : memref<64x32xf32, #tpu.memory_space<vmem>>, vector<64x32xf32>,
    return
  }
  func.func @transform_0(%arg0: i32) -> (i32, i32) {
    %c0_i32 = arith.constant 0 : i32
    %c0_i32_0 = arith.constant 0 : i32
    return %arg0, %c0_i32 : i32, i32
  }
  func.func @transform_1(%arg0: i32) -> (i32, i32) {
    %c0_i32 = arith.constant 0 : i32
    %c0_i32_0 = arith.constant 0 : i32
    %c0_i32_1 = arith.constant 0 : i32
    return %c0_i32, %c0_i32_0 : i32, i32
  }
  func.func @transform_2(%arg0: i32) -> (i32, i32) {
    %c0_i32 = arith.constant 0 : i32
    %c0_i32_0 = arith.constant 0 : i32
    %c0_i32_1 = arith.constant 0 : i32
    return %c0_i32, %c0_i32_0 : i32, i32
  }
  func.func @transform_3(%arg0: i32) -> (i32, i32) {
    %c0_i32 = arith.constant 0 : i32
    %c0_i32_0 = arith.constant 0 : i32
    return %arg0, %c0_i32 : i32, i32
  }
}

</mosaic_0001>

<llo_original>
// kernel: tpu_custom_call.1
$region0: #{tpu_custom_call.1}
  #allocation0 [shape = 'u32[]', space=smem, size = 0x4, offset = 0x4, fixed_abs, tag = 'smem constant byte address 0x4 - core index']
  #allocation1 [shape = 'u32[144,128]{1,0:T(1,128)}', space=vmem, size = 0x12000, scoped, tag = 'internal scratch']
  %s0 = inlined_call_operand.vmem [shape: f32[64,64], index: 0, kind: input, shape index: {}]
  %s1 = inlined_call_operand.vmem [shape: f32[64,32], index: 1, kind: input, shape index: {}]
  %s2 = inlined_call_operand.vmem [shape: f32[1,32], index: 2, kind: input, shape index: {}]
  %s3 = inlined_call_operand.vmem [shape: f32[64,32], index: 3, kind: output, shape index: {}]
  %s4 = sld [smem:[#allocation0]]
  $region22: #{tpu_custom_call.1} parent=0
    _
  %s6 = ssub.s32 1, %s4
  %s7 = scalar_select 0, %s6, %s4
  // Predicated region
  $region2: #{tpu_custom_call.1} parent=0 // pred_check
    _
  $region3: #{tpu_custom_call.1} parent=0 // pred_check_branch
    %9 = sbr.rel (0) target = $region5
  $region4: #{tpu_custom_call.1} parent=0 // pred_region
    _
  $region5: #{tpu_custom_call.1} parent=0 // pred_fallthru
    _
  // Predicated region
  $region6: #{tpu_custom_call.1} parent=0 // pred_check
    _
  $region7: #{tpu_custom_call.1} parent=0 // pred_check_branch
    %11 = sbr.rel (0) target = $region9
  $region8: #{tpu_custom_call.1} parent=0 // pred_region
    _
  $region9: #{tpu_custom_call.1} parent=0 // pred_fallthru
    _
  // Predicated region
  $region10: #{tpu_custom_call.1} parent=0 // pred_check
    _
  $region11: #{tpu_custom_call.1} parent=0 // pred_check_branch
    %13 = sbr.rel (0) target = $region13
  $region12: #{tpu_custom_call.1} parent=0 // pred_region
    _
  $region13: #{tpu_custom_call.1} parent=0 // pred_fallthru
    _
  %v14 = vld [vmem:[%s1] sm:$0xff]
  %v15 = vld [vmem:[%s1 + $0x8] sm:$0xff]
  %v16 = vld [vmem:[%s1 + $0x10] sm:$0xff]
  %v17 = vld [vmem:[%s1 + $0x18] sm:$0xff]
  %v18 = vld [vmem:[%s1 + $0x20] sm:$0xff]
  %v19 = vld [vmem:[%s1 + $0x28] sm:$0xff]
  %v20 = vld [vmem:[%s1 + $0x30] sm:$0xff]
  %v21 = vld [vmem:[%s1 + $0x38] sm:$0xff]
  %v22 = vld [vmem:[%s0] sm:$0xff]
  %v23 = vld [vmem:[%s0 + $0x8] sm:$0xff]
  %v24 = vld [vmem:[%s0 + $0x10] sm:$0xff]
  %v25 = vld [vmem:[%s0 + $0x18] sm:$0xff]
  %v26 = vld [vmem:[%s0 + $0x20] sm:$0xff]
  %v27 = vld [vmem:[%s0 + $0x28] sm:$0xff]
  %v28 = vld [vmem:[%s0 + $0x30] sm:$0xff]
  %v29 = vld [vmem:[%s0 + $0x38] sm:$0xff]
  %v30 = vld [vmem:[%s2] sm:$0x1]
  %v32 = vlaneseq
  %v33 = vshrl.u32 %v32, 7
  %v34 = vsub.s32 0, %v33
  %v35 = vrot.slane %v30, %v34
  %vm37 = vcmask 523264
  %v39 = vsel %vm37, %v22, 0
  %v42 = vsel %vm37, %v23, 0
  %v45 = vsel %vm37, %v24, 0
  %v48 = vsel %vm37, %v25, 0
  %v51 = vsel %vm37, %v26, 0
  %v54 = vsel %vm37, %v27, 0
  %v57 = vsel %vm37, %v28, 0
  %v60 = vsel %vm37, %v29, 0
  %62 = vmatprep.subr.mxu0 0.0
  %63 = vmatpush1.msra.mxu0 %v14
  %64 = vmatprep.subr.mxu0 0.0
  %65 = vmatpush1.msra.mxu0 %v15
  %66 = vmatprep.subr.mxu0 0.0
  %67 = vmatpush1.msra.mxu0 %v16
  %68 = vmatprep.subr.mxu0 0.0
  %69 = vmatpush1.msra.mxu0 %v17
  %70 = vmatprep.subr.mxu0 0.0
  %71 = vmatpush1.msra.mxu0 %v18
  %72 = vmatprep.subr.mxu0 0.0
  %73 = vmatpush1.msra.mxu0 %v19
  %74 = vmatprep.subr.mxu0 0.0
  %75 = vmatpush1.msra.mxu0 %v20
  %76 = vmatprep.subr.mxu0 0.0
  %77 = vmatpush1.msra.mxu0 %v21
  %78 = vmatprep.subr.mxu0 0.0
  %79 = vmatpush1.msra.mxu0 0.0
  %80 = vmatprep.subr.mxu0 0.0
  %81 = vmatpush1.msra.mxu0 0.0
  %82 = vmatprep.subr.mxu0 0.0
  %83 = vmatpush1.msra.mxu0 0.0
  %84 = vmatprep.subr.mxu0 0.0
  %85 = vmatpush1.msra.mxu0 0.0
  %86 = vmatprep.subr.mxu0 0.0
  %87 = vmatpush1.msra.mxu0 0.0
  %88 = vmatprep.subr.mxu0 0.0
  %89 = vmatpush1.msra.mxu0 0.0
  %90 = vmatprep.subr.mxu0 0.0
  %91 = vmatpush1.msra.mxu0 0.0
  %92 = vmatprep.subr.mxu0 0.0
  %93 = vmatpush1.msra.mxu0 0.0
  %94 = vmatprep.subr.mxu0 0.0
  %95 = vmatpush1.msra.mxu0 0.0
  %96 = vmatprep.subr.mxu0 0.0
  %97 = vmatpush1.msra.mxu0 0.0
  %98 = vmatprep.subr.mxu0 0.0
  %99 = vmatpush1.msra.mxu0 0.0
  %100 = vmatprep.subr.mxu0 0.0
  %101 = vmatpush1.msra.mxu0 0.0
  %102 = vmatprep.subr.mxu0 0.0
  %103 = vmatpush1.msra.mxu0 0.0
  %104 = vmatprep.subr.mxu0 0.0
  %105 = vmatpush1.msra.mxu0 0.0
  %106 = vmatprep.subr.mxu0 0.0
  %107 = vmatpush1.msra.mxu0 0.0
  %108 = vmatprep.subr.mxu0 0.0
  %109 = vmatpush1.msra.mxu0 0.0
  %110 = vmatprep.subr.mxu0 0.0
  %111 = vmatpush1.msra.mxu0 0.0
  %112 = vmatprep.subr.mxu0 0.0
  %113 = vmatpush1.msra.mxu0 0.0
  %114 = vmatprep.subr.mxu0 0.0
  %115 = vmatpush1.msra.mxu0 0.0
  %116 = vmatprep.subr.mxu0 0.0
  %117 = vmatpush1.msra.mxu0 0.0
  %118 = vmatprep.subr.mxu0 0.0
  %119 = vmatpush1.msra.mxu0 0.0
  %120 = vmatprep.subr.mxu0 0.0
  %121 = vmatpush1.msra.mxu0 0.0
  %122 = vmatprep.subr.mxu0 0.0
  %123 = vmatpush1.msra.mxu0 0.0
  %124 = vmatprep.subr.mxu0 0.0
  %125 = vmatpush1.msra.mxu0 0.0
  %126 = vmatprep.mubr.f32.mxu0 0.0
  %127 = vmatmul.mubr.f32.gmra.mrb[0].mxu0 %v39
  %v128 = vpop.f32.mrb[0].mxu0
  %v129 = vadd.f32 %v35, %v128
  %v130 = vpop.f32.mrb[0].mxu0
  %131 = vmatprep.mubr.f32.mxu0 0.0
  %132 = vmatmul.mubr.f32.gmra.mrb[0].mxu0 %v42
  %v133 = vpop.f32.mrb[0].mxu0
  %v134 = vadd.f32 %v35, %v133
  %v135 = vpop.f32.mrb[0].mxu0
  %136 = vmatprep.mubr.f32.mxu0 0.0
  %137 = vmatmul.mubr.f32.gmra.mrb[0].mxu0 %v45
  %v138 = vpop.f32.mrb[0].mxu0
  %v139 = vadd.f32 %v35, %v138
  %v140 = vpop.f32.mrb[0].mxu0
  %141 = vmatprep.mubr.f32.mxu0 0.0
  %142 = vmatmul.mubr.f32.gmra.mrb[0].mxu0 %v48
  %v143 = vpop.f32.mrb[0].mxu0
  %v144 = vadd.f32 %v35, %v143
  %v145 = vpop.f32.mrb[0].mxu0
  %146 = vmatprep.mubr.f32.mxu0 0.0
  %147 = vmatmul.mubr.f32.gmra.mrb[0].mxu0 %v51
  %v148 = vpop.f32.mrb[0].mxu0
  %v149 = vadd.f32 %v35, %v148
  %v150 = vpop.f32.mrb[0].mxu0
  %151 = vmatprep.mubr.f32.mxu0 0.0
  %152 = vmatmul.mubr.f32.gmra.mrb[0].mxu0 %v54
  %v153 = vpop.f32.mrb[0].mxu0
  %v154 = vadd.f32 %v35, %v153
  %v155 = vpop.f32.mrb[0].mxu0
  %156 = vmatprep.mubr.f32.mxu0 0.0
  %157 = vmatmul.mubr.f32.gmra.mrb[0].mxu0 %v57
  %v158 = vpop.f32.mrb[0].mxu0
  %v159 = vadd.f32 %v35, %v158
  %v160 = vpop.f32.mrb[0].mxu0
  %161 = vmatprep.mubr.f32.mxu0 0.0
  %162 = vmatmul.mubr.f32.gmra.mrb[0].mxu0 %v60
  %v163 = vpop.f32.mrb[0].mxu0
  %v164 = vadd.f32 %v35, %v163
  %v165 = vpop.f32.mrb[0].mxu0
  %166 = vdwg.mxu0
  %vm167 = vcmask 261120
  %168 = vst.msk [vmem:[%s3] sm:$0xff] %vm167, %v129
  %169 = vst.msk [vmem:[%s3 + $0x8] sm:$0xff] %vm167, %v134
  %170 = vst.msk [vmem:[%s3 + $0x10] sm:$0xff] %vm167, %v139
  %171 = vst.msk [vmem:[%s3 + $0x18] sm:$0xff] %vm167, %v144
  %172 = vst.msk [vmem:[%s3 + $0x20] sm:$0xff] %vm167, %v149
  %173 = vst.msk [vmem:[%s3 + $0x28] sm:$0xff] %vm167, %v154
  %174 = vst.msk [vmem:[%s3 + $0x30] sm:$0xff] %vm167, %v159
  %175 = vst.msk [vmem:[%s3 + $0x38] sm:$0xff] %vm167, %v164
  // Predicated region
  $region14: #{tpu_custom_call.1} parent=0 // pred_check
    _
  $region15: #{tpu_custom_call.1} parent=0 // pred_check_branch
    %177 = sbr.rel (0) target = $region17
  $region16: #{tpu_custom_call.1} parent=0 // pred_region
    _
  $region17: #{tpu_custom_call.1} parent=0 // pred_fallthru
    _
  // Predicated region
  $region18: #{tpu_custom_call.1} parent=0 // pred_check
    _
  $region19: #{tpu_custom_call.1} parent=0 // pred_check_branch
    %179 = sbr.rel (0) target = $region21
  $region20: #{tpu_custom_call.1} parent=0 // pred_region
    _
  $region21: #{tpu_custom_call.1} parent=0 // pred_fallthru
    _

</llo_original>
